<compile_context>
chip_gen: v5e
topology: v5e:2x2
jax: 0.10.0
libtpu: 0.0.40
codegen_flags: <defaults>
</compile_context>

<pallas_src>
import functools

import jax
import jax.numpy as jnp
from jax.experimental import pallas as pl
from jax.experimental.pallas import tpu as pltpu

BN_EPS = 1e-5


def _mlp_kernel(x_ref,
                w1_ref, b1_ref,
                w2_ref, b2_ref,
                w3_ref, b3_ref,
                w4_ref, b4_ref,
                out_ref):
    x = x_ref[...].astype(jnp.float32)

    # fc1 (+ folded bn1) -> relu.  K=2: two VPU broadcast FMAs, skip the MXU.
    h = (x[:, 0:1] * w1_ref[0:1, :]
         + x[:, 1:2] * w1_ref[1:2, :]
         + b1_ref[...])
    h = jnp.maximum(h, 0.0)
    # dropout: identity in eval mode.

    # fc2 (+ folded bn2) -> relu
    h = jnp.dot(h.astype(w2_ref.dtype), w2_ref[...],
                preferred_element_type=jnp.float32) + b2_ref[...]
    h = jnp.maximum(h, 0.0)
    # dropout: identity in eval mode.

    # fc3 -> relu
    h = jnp.dot(h.astype(w3_ref.dtype), w3_ref[...],
                preferred_element_type=jnp.float32) + b3_ref[...]
    h = jnp.maximum(h, 0.0)

    # fc4 -> logits (narrow last dim; masked vst stores are acceptable here:
    # the store slot has slack and HBM writeback bytes dominate otherwise).
    out = jnp.dot(h.astype(w4_ref.dtype), w4_ref[...],
                  preferred_element_type=jnp.float32) + b4_ref[...]
    out_ref[...] = out.astype(out_ref.dtype)


def _const_spec(arr):
    """Resident weight/bias block: constant index_map, single-buffered."""
    index_map = lambda i, _nd=arr.ndim: (0,) * _nd
    try:
        return pl.BlockSpec(arr.shape, index_map, pipeline_mode=pl.Buffered(1))
    except TypeError:   # older jax without pipeline_mode kwarg
        return pl.BlockSpec(arr.shape, index_map)


def complex_subject_predictor(x, params, *, compute_dtype=jnp.bfloat16):
    """Eval-mode forward of ComplexSubjectPredictor as one tiled Pallas kernel.

    compute_dtype: dtype of the MXU matmul operands (w2/w3/w4 + activation
    casts).  bf16 by default (v6e/v7x MXU-native, also fine on v5e); f32
    accumulation and f32 elementwise math are always used.
    """
    batch, in_dim = x.shape
    num_subjects = params["w4"].shape[1]

    # ---- Fold BatchNorm into the preceding Linear (eval-mode only). -------
    s1 = params["g1"] * jax.lax.rsqrt(params["v1"] + BN_EPS)            # (1, 64)
    w1f = (params["w1"] * s1).astype(jnp.float32)                       # (2, 64)  VPU path, keep f32
    b1f = ((params["b1"] - params["m1"]) * s1 + params["be1"]).astype(jnp.float32)

    s2 = params["g2"] * jax.lax.rsqrt(params["v2"] + BN_EPS)            # (1, 128)
    w2f = (params["w2"] * s2).astype(compute_dtype)                     # (64, 128)
    b2f = ((params["b2"] - params["m2"]) * s2 + params["be2"]).astype(jnp.float32)

    w3 = params["w3"].astype(compute_dtype)                             # (128, 64)
    b3 = params["b3"].astype(jnp.float32)
    w4 = params["w4"].astype(compute_dtype)                             # (64, num_subjects)
    b4 = params["b4"].astype(jnp.float32)

    x = x.astype(jnp.float32)

    # ---- Batch tile selection. ---------------------------------------------
    TB = 2048
    if batch <= TB:
        if batch >= 16:
            # Prefer a grid of >= 2 steps so both v7x TensorCores get work.
            TB = max(8, ((pl.cdiv(batch, 2) + 7) // 8) * 8)
        else:
            TB = max(8, ((batch + 7) // 8) * 8)
    grid = (pl.cdiv(batch, TB),)   # ragged last block handled by Pallas

    operands = (x, w1f, b1f, w2f, b2f, w3, b3, w4, b4)

    in_specs = [pl.BlockSpec((TB, in_dim), lambda i: (i, 0))] + \
               [_const_spec(a) for a in operands[1:]]
    out_specs = pl.BlockSpec((TB, num_subjects), lambda i: (i, 0))

    param_bytes = sum(int(a.size) * a.dtype.itemsize for a in operands[1:])
    cost = pl.CostEstimate(
        flops=2 * batch * (in_dim * 64 + 64 * 128 + 128 * 64 + 64 * num_subjects),
        transcendentals=0,
        bytes_accessed=batch * (in_dim * 4 + num_subjects * 4) + param_bytes,
    )

    out = pl.pallas_call(
        _mlp_kernel,
        out_shape=jax.ShapeDtypeStruct((batch, num_subjects), jnp.float32),
        grid=grid,
        in_specs=in_specs,
        out_specs=out_specs,
        compiler_params=pltpu.CompilerParams(
            dimension_semantics=("parallel",)),
        cost_estimate=cost,
    )(*operands)

    return out   # exact shape, no post-kernel slice / HBM re-read


# ---------------------------------------------------------------------------
# Synthetic parameters + pure-JAX reference (for the self-test).
# ---------------------------------------------------------------------------
def init_params(key, num_subjects):
    """Deterministic synthetic parameters matching the PyTorch module's shapes."""
    ks = jax.random.split(key, 16)

    def linear(kw, kb, fan_in, fan_out):
        # PyTorch nn.Linear weight is (out, in); store transposed (in, out).
        bound = 1.0 / jnp.sqrt(fan_in)
        w = jax.random.uniform(kw, (fan_in, fan_out), jnp.float32, -bound, bound)
        b = jax.random.uniform(kb, (1, fan_out), jnp.float32, -bound, bound)
        return w, b

    def bn(kg, kb, km, kv, n):
        gamma = jax.random.uniform(kg, (1, n), jnp.float32, 0.5, 1.5)
        beta = 0.1 * jax.random.normal(kb, (1, n), jnp.float32)
        mean = 0.1 * jax.random.normal(km, (1, n), jnp.float32)
        var = jax.random.uniform(kv, (1, n), jnp.float32, 0.5, 1.5)
        return gamma, beta, mean, var

    w1, b1 = linear(ks[0], ks[1], 2, 64)
    g1, be1, m1, v1 = bn(ks[2], ks[3], ks[4], ks[5], 64)
    w2, b2 = linear(ks[6], ks[7], 64, 128)
    g2, be2, m2, v2 = bn(ks[8], ks[9], ks[10], ks[11], 128)
    w3, b3 = linear(ks[12], ks[13], 128, 64)
    w4, b4 = linear(ks[14], ks[15], 64, num_subjects)

    return {
        "w1": w1, "b1": b1, "g1": g1, "be1": be1, "m1": m1, "v1": v1,
        "w2": w2, "b2": b2, "g2": g2, "be2": be2, "m2": m2, "v2": v2,
        "w3": w3, "b3": b3,
        "w4": w4, "b4": b4,
    }


def reference_forward(x, p):
    """Pure-JAX reference of the same eval-mode forward (unfolded BN)."""
    h = x @ p["w1"] + p["b1"]
    h = (h - p["m1"]) / jnp.sqrt(p["v1"] + BN_EPS) * p["g1"] + p["be1"]
    h = jnp.maximum(h, 0.0)
    h = h @ p["w2"] + p["b2"]
    h = (h - p["m2"]) / jnp.sqrt(p["v2"] + BN_EPS) * p["g2"] + p["be2"]
    h = jnp.maximum(h, 0.0)
    h = jnp.maximum(h @ p["w3"] + p["b3"], 0.0)
    return h @ p["w4"] + p["b4"]


if __name__ == "__main__":
    key = jax.random.PRNGKey(0)
    k_param, k_x = jax.random.split(key)

    num_subjects = 10  # synthetic: len(subject_mapping)
    params = init_params(k_param, num_subjects)

    fwd_f32 = jax.jit(functools.partial(complex_subject_predictor,
                                        compute_dtype=jnp.float32))
    fwd_bf16 = jax.jit(complex_subject_predictor)   # default bf16 MXU operands

    # batch=8: single aligned tile; batch=200: 2 grid steps with a ragged
    # last block (exercises masked writeback / both TCs on v7x).
    for batch in (8, 200):
        x = jax.random.normal(jax.random.fold_in(k_x, batch),
                              (batch, 2), jnp.float32)
        ref = reference_forward(x, params)

        out = jax.block_until_ready(fwd_f32(x, params))
        assert out.shape == (batch, num_subjects)
        assert jnp.allclose(out, ref, atol=1e-4, rtol=1e-4), \
            f"f32 mismatch at batch={batch}"

        out_bf = jax.block_until_ready(fwd_bf16(x, params))
        assert out_bf.shape == (batch, num_subjects)
        assert jnp.allclose(out_bf, ref, atol=1e-1, rtol=1e-1), \
            f"bf16 mismatch at batch={batch}"

    print("KERNEL_OK")
</pallas_src>

<mosaic_0001>
module attributes {stable_mosaic.version = 11 : i64} {
  func.func @_mlp_kernel(%arg0: i32, %arg1: memref<8x2xf32, #tpu.memory_space<vmem>>, %arg2: memref<2x64xf32, #tpu.memory_space<vmem>>, %arg3: memref<1x64xf32, #tpu.memory_space<vmem>>, %arg4: memref<64x128xf32, #tpu.memory_space<vmem>>, %arg5: memref<1x128xf32, #tpu.memory_space<vmem>>, %arg6: memref<128x64xf32, #tpu.memory_space<vmem>>, %arg7: memref<1x64xf32, #tpu.memory_space<vmem>>, %arg8: memref<64x10xf32, #tpu.memory_space<vmem>>, %arg9: memref<1x10xf32, #tpu.memory_space<vmem>>, %arg10: memref<8x10xf32, #tpu.memory_space<vmem>>) attributes {dimension_semantics = [#tpu.dimension_semantics<parallel>], iteration_bounds = array<i64: 1>, scalar_prefetch = 0 : i64, scratch_operands = 0 : i64, tpu.core_type = #tpu.core_type<tc>, window_params = [{transform_indices = @transform_0, window_bounds = array<i64: 8, 2>}, {pipeline_mode = #tpu.pipeline_mode<synchronous>, transform_indices = @transform_1, window_bounds = array<i64: 2, 64>}, {pipeline_mode = #tpu.pipeline_mode<synchronous>, transform_indices = @transform_2, window_bounds = array<i64: 1, 64>}, {pipeline_mode = #tpu.pipeline_mode<synchronous>, transform_indices = @transform_3, window_bounds = array<i64: 64, 128>}, {pipeline_mode = #tpu.pipeline_mode<synchronous>, transform_indices = @transform_4, window_bounds = array<i64: 1, 128>}, {pipeline_mode = #tpu.pipeline_mode<synchronous>, transform_indices = @transform_5, window_bounds = array<i64: 128, 64>}, {pipeline_mode = #tpu.pipeline_mode<synchronous>, transform_indices = @transform_6, window_bounds = array<i64: 1, 64>}, {pipeline_mode = #tpu.pipeline_mode<synchronous>, transform_indices = @transform_7, window_bounds = array<i64: 64, 10>}, {pipeline_mode = #tpu.pipeline_mode<synchronous>, transform_indices = @transform_8, window_bounds = array<i64: 1, 10>}, {transform_indices = @transform_9, window_bounds = array<i64: 8, 10>}]} {
    %c0 = arith.constant 0 : index
    %c0_0 = arith.constant 0 : index
    %0 = vector.load %arg1[%c0, %c0_0] : memref<8x2xf32, #tpu.memory_space<vmem>>, vector<8x2xf32>
    %1 = vector.extract_strided_slice %0 {offsets = [0, 0], sizes = [8, 1], strides = [1, 1]} : vector<8x2xf32> to vector<8x1xf32>
    %c0_1 = arith.constant 0 : index
    %c0_2 = arith.constant 0 : index
    %2 = vector.load %arg2[%c0_1, %c0_2] : memref<2x64xf32, #tpu.memory_space<vmem>>, vector<1x64xf32>
    %3 = vector.broadcast %1 : vector<8x1xf32> to vector<8x64xf32>
    %4 = vector.broadcast %2 : vector<1x64xf32> to vector<8x64xf32>
    %5 = arith.mulf %3, %4 : vector<8x64xf32>
    %6 = vector.extract_strided_slice %0 {offsets = [0, 1], sizes = [8, 1], strides = [1, 1]} : vector<8x2xf32> to vector<8x1xf32>
    %c1 = arith.constant 1 : index
    %c0_3 = arith.constant 0 : index
    %7 = vector.load %arg2[%c1, %c0_3] : memref<2x64xf32, #tpu.memory_space<vmem>>, vector<1x64xf32>
    %8 = vector.broadcast %6 : vector<8x1xf32> to vector<8x64xf32>
    %9 = vector.broadcast %7 : vector<1x64xf32> to vector<8x64xf32>
    %10 = arith.mulf %8, %9 : vector<8x64xf32>
    %11 = arith.addf %5, %10 : vector<8x64xf32>
    %c0_4 = arith.constant 0 : index
    %c0_5 = arith.constant 0 : index
    %12 = vector.load %arg3[%c0_4, %c0_5] : memref<1x64xf32, #tpu.memory_space<vmem>>, vector<1x64xf32>
    %13 = vector.broadcast %12 : vector<1x64xf32> to vector<8x64xf32>
    %14 = arith.addf %11, %13 : vector<8x64xf32>
    %cst = arith.constant 0.000000e+00 : f32
    %15 = vector.broadcast %cst : f32 to vector<8x64xf32>
    %16 = arith.maximumf %14, %15 : vector<8x64xf32>
    %c0_6 = arith.constant 0 : index
    %c0_7 = arith.constant 0 : index
    %17 = vector.load %arg4[%c0_6, %c0_7] : memref<64x128xf32, #tpu.memory_space<vmem>>, vector<64x128xf32>
    %cst_8 = arith.constant dense<0.000000e+00> : vector<8x128xf32>
    %18 = tpu.matmul %16, %17, %cst_8 {dimension_numbers = #tpu.dot_dimension_numbers<[1], [0], [0], [1], [0, 0, 1, 1], [], []>} : vector<8x64xf32>, vector<64x128xf32>, vector<8x128xf32> -> vector<8x128xf32>
    %c0_9 = arith.constant 0 : index
    %c0_10 = arith.constant 0 : index
    %19 = vector.load %arg5[%c0_9, %c0_10] : memref<1x128xf32, #tpu.memory_space<vmem>>, vector<1x128xf32>
    %20 = vector.broadcast %19 : vector<1x128xf32> to vector<8x128xf32>
    %21 = arith.addf %18, %20 : vector<8x128xf32>
    %cst_11 = arith.constant 0.000000e+00 : f32
    %22 = vector.broadcast %cst_11 : f32 to vector<8x128xf32>
    %23 = arith.maximumf %21, %22 : vector<8x128xf32>
    %c0_12 = arith.constant 0 : index
    %c0_13 = arith.constant 0 : index
    %24 = vector.load %arg6[%c0_12, %c0_13] : memref<128x64xf32, #tpu.memory_space<vmem>>, vector<128x64xf32>
    %cst_14 = arith.constant dense<0.000000e+00> : vector<8x64xf32>
    %25 = tpu.matmul %23, %24, %cst_14 {dimension_numbers = #tpu.dot_dimension_numbers<[1], [0], [0], [1], [0, 0, 1, 1], [], []>} : vector<8x128xf32>, vector<128x64xf32>, vector<8x64xf32> -> vector<8x64xf32>
    %c0_15 = arith.constant 0 : index
    %c0_16 = arith.constant 0 : index
    %26 = vector.load %arg7[%c0_15, %c0_16] : memref<1x64xf32, #tpu.memory_space<vmem>>, vector<1x64xf32>
    %27 = vector.broadcast %26 : vector<1x64xf32> to vector<8x64xf32>
    %28 = arith.addf %25, %27 : vector<8x64xf32>
    %cst_17 = arith.constant 0.000000e+00 : f32
    %29 = vector.broadcast %cst_17 : f32 to vector<8x64xf32>
    %30 = arith.maximumf %28, %29 : vector<8x64xf32>
    %c0_18 = arith.constant 0 : index
    %c0_19 = arith.constant 0 : index
    %31 = vector.load %arg8[%c0_18, %c0_19] : memref<64x10xf32, #tpu.memory_space<vmem>>, vector<64x10xf32>
    %cst_20 = arith.constant dense<0.000000e+00> : vector<8x10xf32>
    %32 = tpu.matmul %30, %31, %cst_20 {dimension_numbers = #tpu.dot_dimension_numbers<[1], [0], [0], [1], [0, 0, 1, 1], [], []>} : vector<8x64xf32>, vector<64x10xf32>, vector<8x10xf32> -> vector<8x10xf32>
    %c0_21 = arith.constant 0 : index
    %c0_22 = arith.constant 0 : index
    %33 = vector.load %arg9[%c0_21, %c0_22] : memref<1x10xf32, #tpu.memory_space<vmem>>, vector<1x10xf32>
    %34 = vector.broadcast %33 : vector<1x10xf32> to vector<8x10xf32>
    %35 = arith.addf %32, %34 : vector<8x10xf32>
    %c0_23 = arith.constant 0 : index
    %c0_24 = arith.constant 0 : index
    %36 = vector.load %arg10[%c0_23, %c0_24] : memref<8x10xf32, #tpu.memory_space<vmem>>, vector<8x10xf32>
    tpu.vector_store %arg10[%c0_23, %c0_24], %35 {strides = array<i32>} : memref<8x10xf32, #tpu.memory_space<vmem>>, vector<8x10xf32>,
    return
  }
  func.func @transform_0(%arg0: i32) -> (i32, i32) {
    %c0_i32 = arith.constant 0 : i32
    %c0_i32_0 = arith.constant 0 : i32
    return %arg0, %c0_i32 : i32, i32
  }
  func.func @transform_1(%arg0: i32) -> (i32, i32) {
    %c0_i32 = arith.constant 0 : i32
    %c0_i32_0 = arith.constant 0 : i32
    %c0_i32_1 = arith.constant 0 : i32
    return %c0_i32, %c0_i32_0 : i32, i32
  }
  func.func @transform_2(%arg0: i32) -> (i32, i32) {
    %c0_i32 = arith.constant 0 : i32
    %c0_i32_0 = arith.constant 0 : i32
    %c0_i32_1 = arith.constant 0 : i32
    return %c0_i32, %c0_i32_0 : i32, i32
  }
  func.func @transform_3(%arg0: i32) -> (i32, i32) {
    %c0_i32 = arith.constant 0 : i32
    %c0_i32_0 = arith.constant 0 : i32
    %c0_i32_1 = arith.constant 0 : i32
    return %c0_i32, %c0_i32_0 : i32, i32
  }
  func.func @transform_4(%arg0: i32) -> (i32, i32) {
    %c0_i32 = arith.constant 0 : i32
    %c0_i32_0 = arith.constant 0 : i32
    %c0_i32_1 = arith.constant 0 : i32
    return %c0_i32, %c0_i32_0 : i32, i32
  }
  func.func @transform_5(%arg0: i32) -> (i32, i32) {
    %c0_i32 = arith.constant 0 : i32
    %c0_i32_0 = arith.constant 0 : i32
    %c0_i32_1 = arith.constant 0 : i32
    return %c0_i32, %c0_i32_0 : i32, i32
  }
  func.func @transform_6(%arg0: i32) -> (i32, i32) {
    %c0_i32 = arith.constant 0 : i32
    %c0_i32_0 = arith.constant 0 : i32
    %c0_i32_1 = arith.constant 0 : i32
    return %c0_i32, %c0_i32_0 : i32, i32
  }
  func.func @transform_7(%arg0: i32) -> (i32, i32) {
    %c0_i32 = arith.constant 0 : i32
    %c0_i32_0 = arith.constant 0 : i32
    %c0_i32_1 = arith.constant 0 : i32
    return %c0_i32, %c0_i32_0 : i32, i32
  }
  func.func @transform_8(%arg0: i32) -> (i32, i32) {
    %c0_i32 = arith.constant 0 : i32
    %c0_i32_0 = arith.constant 0 : i32
    %c0_i32_1 = arith.constant 0 : i32
    return %c0_i32, %c0_i32_0 : i32, i32
  }
  func.func @transform_9(%arg0: i32) -> (i32, i32) {
    %c0_i32 = arith.constant 0 : i32
    %c0_i32_0 = arith.constant 0 : i32
    return %arg0, %c0_i32 : i32, i32
  }
}

</mosaic_0001>

<llo_original>
// kernel: complex_subject_predictor.1
$region0: #{complex_subject_predictor.1}
  #allocation0 [shape = 'u32[]', space=smem, size = 0x4, offset = 0x4, fixed_abs, tag = 'smem constant byte address 0x4 - core index']
  #allocation1 [shape = 'u32[72,128]{1,0:T(1,128)}', space=vmem, size = 0x9000, scoped, tag = 'internal scratch']
  %s0 = inlined_call_operand.vmem [shape: f32[8,2], index: 0, kind: input, shape index: {}]
  %s1 = inlined_call_operand.vmem [shape: f32[2,64], index: 1, kind: input, shape index: {}]
  %s2 = inlined_call_operand.vmem [shape: f32[1,64], index: 2, kind: input, shape index: {}]
  %s3 = inlined_call_operand.vmem [shape: f32[64,128], index: 3, kind: input, shape index: {}]
  %s4 = inlined_call_operand.vmem [shape: f32[1,128], index: 4, kind: input, shape index: {}]
  %s5 = inlined_call_operand.vmem [shape: f32[128,64], index: 5, kind: input, shape index: {}]
  %s6 = inlined_call_operand.vmem [shape: f32[1,64], index: 6, kind: input, shape index: {}]
  %s7 = inlined_call_operand.vmem [shape: f32[64,10], index: 7, kind: input, shape index: {}]
  %s8 = inlined_call_operand.vmem [shape: f32[1,10], index: 8, kind: input, shape index: {}]
  %s9 = inlined_call_operand.hbm [shape: f32[8,10], index: 9, kind: output, shape index: {}]
  %s10 = sld [smem:[#allocation0]]
  $region46: #{complex_subject_predictor.1} parent=0
    _
  %s12 = ssub.s32 1, %s10
  %s13 = scalar_select 0, %s12, %s10
  $region1: #{complex_subject_predictor.1} parent=0
    #allocation2 [shape = 'u8[4096]{0}', space=vmem, size = 0x1000, scoped, tag = 'output window, operand 0, single buffered']
    #allocation3 [shape = 's32[1]{0}', space=sflag, size = 0x4, scoped, tag = 'scoped memory for complex_subject_predictor.1']
    %14 = vsyncpa [#allocation3], 0
    // Predicated region
    $region2: #{complex_subject_predictor.1} parent=1 // pred_check
      _
    $region3: #{complex_subject_predictor.1} parent=1 // pred_check_branch
      %16 = sbr.rel (0) target = $region5
    $region4: #{complex_subject_predictor.1} parent=1 // pred_region
      _
    $region5: #{complex_subject_predictor.1} parent=1 // pred_fallthru
      _
    // Predicated region
    $region6: #{complex_subject_predictor.1} parent=1 // pred_check
      _
    $region7: #{complex_subject_predictor.1} parent=1 // pred_check_branch
      %18 = sbr.rel (0) target = $region9
    $region8: #{complex_subject_predictor.1} parent=1 // pred_region
      _
    $region9: #{complex_subject_predictor.1} parent=1 // pred_fallthru
      _
    // Predicated region
    $region10: #{complex_subject_predictor.1} parent=1 // pred_check
      _
    $region11: #{complex_subject_predictor.1} parent=1 // pred_check_branch
      %20 = sbr.rel (0) target = $region13
    $region12: #{complex_subject_predictor.1} parent=1 // pred_region
      _
    $region13: #{complex_subject_predictor.1} parent=1 // pred_fallthru
      _
    // Predicated region
    $region14: #{complex_subject_predictor.1} parent=1 // pred_check
      _
    $region15: #{complex_subject_predictor.1} parent=1 // pred_check_branch
      %22 = sbr.rel (0) target = $region17
    $region16: #{complex_subject_predictor.1} parent=1 // pred_region
      _
    $region17: #{complex_subject_predictor.1} parent=1 // pred_fallthru
      _
    // Predicated region
    $region18: #{complex_subject_predictor.1} parent=1 // pred_check
      _
    $region19: #{complex_subject_predictor.1} parent=1 // pred_check_branch
      %24 = sbr.rel (0) target = $region21
    $region20: #{complex_subject_predictor.1} parent=1 // pred_region
      _
    $region21: #{complex_subject_predictor.1} parent=1 // pred_fallthru
      _
    // Predicated region
    $region22: #{complex_subject_predictor.1} parent=1 // pred_check
      _
    $region23: #{complex_subject_predictor.1} parent=1 // pred_check_branch
      %26 = sbr.rel (0) target = $region25
    $region24: #{complex_subject_predictor.1} parent=1 // pred_region
      _
    $region25: #{complex_subject_predictor.1} parent=1 // pred_fallthru
      _
    // Predicated region
    $region26: #{complex_subject_predictor.1} parent=1 // pred_check
      _
    $region27: #{complex_subject_predictor.1} parent=1 // pred_check_branch
      %28 = sbr.rel (0) target = $region29
    $region28: #{complex_subject_predictor.1} parent=1 // pred_region
      _
    $region29: #{complex_subject_predictor.1} parent=1 // pred_fallthru
      _
    // Predicated region
    $region30: #{complex_subject_predictor.1} parent=1 // pred_check
      _
    $region31: #{complex_subject_predictor.1} parent=1 // pred_check_branch
      %30 = sbr.rel (0) target = $region33
    $region32: #{complex_subject_predictor.1} parent=1 // pred_region
      _
    $region33: #{complex_subject_predictor.1} parent=1 // pred_fallthru
      _
    // Predicated region
    $region34: #{complex_subject_predictor.1} parent=1 // pred_check
      _
    $region35: #{complex_subject_predictor.1} parent=1 // pred_check_branch
      %32 = sbr.rel (0) target = $region37
    $region36: #{complex_subject_predictor.1} parent=1 // pred_region
      _
    $region37: #{complex_subject_predictor.1} parent=1 // pred_fallthru
      _
    %v33 = vld [vmem:[%s0] sm:$0xff]
    %v34 = vld [vmem:[%s1] sm:$0x1]
    %36 = vset.pattern.permute.xlu0 0
    %37 = vperm.xlu0 %36, %v33
    %v38 = vpop.permute.xlu0 %37
    %v40 = vperm.slane %v34, 0
    %v41 = vmul.f32 %v38, %v40
    %v42 = vld [vmem:[%s1 + $0x1] sm:$0x1]
    %43 = vset.pattern.permute.xlu0 1
    %44 = vperm.xlu0 %43, %v33
    %v45 = vpop.permute.xlu0 %44
    %v47 = vperm.slane %v42, 0
    %v48 = vmul.f32 %v45, %v47
    %v49 = vadd.f32 %v41, %v48
    %v50 = vld [vmem:[%s2] sm:$0x1]
    %v52 = vperm.slane %v50, 0
    %v54 = vadd.f32 %v49, %v52
    %v55 = vmax.f32 %v54, 0.0
    %v56 = vld [vmem:[%s3] sm:$0xff]
    %v57 = vld [vmem:[%s3 + $0x8] sm:$0xff]
    %v58 = vld [vmem:[%s3 + $0x10] sm:$0xff]
    %v59 = vld [vmem:[%s3 + $0x18] sm:$0xff]
    %v60 = vld [vmem:[%s3 + $0x20] sm:$0xff]
    %v61 = vld [vmem:[%s3 + $0x28] sm:$0xff]
    %v62 = vld [vmem:[%s3 + $0x30] sm:$0xff]
    %v63 = vld [vmem:[%s3 + $0x38] sm:$0xff]
    %v64 = vld [vmem:[%s4] sm:$0x1]
    %v66 = vperm.slane %v64, 0
    %vm68 = vcmask 523264
    %v70 = vsel %vm68, %v55, 0
    %72 = vmatpush.msra.mxu0 0.0
    %73 = vmatpush.msra.mxu0 0.0
    %74 = vmatpush.msra.mxu0 0.0
    %75 = vmatpush.msra.mxu0 0.0
    %76 = vmatpush.msra.mxu0 0.0
    %77 = vmatpush.msra.mxu0 0.0
    %78 = vmatpush.msra.mxu0 0.0
    %79 = vmatpush.msra.mxu0 0.0
    %80 = vmatpush.msra.mxu0 %v63
    %81 = vmatpush.msra.mxu0 %v62
    %82 = vmatpush.msra.mxu0 %v61
    %83 = vmatpush.msra.mxu0 %v60
    %84 = vmatpush.msra.mxu0 %v59
    %85 = vmatpush.msra.mxu0 %v58
    %86 = vmatpush.msra.mxu0 %v57
    %87 = vmatpush.msra.mxu0 %v56
    %88 = vmatmul.f32.gmra.mxu0 %v70
    %v89 = vpop.f32.mrf.mxu0
    %v90 = vadd.f32 %v66, %v89
    %91 = vdwg.mxu0
    %v92 = vmax.f32 %v90, 0.0
    %v93 = vld [vmem:[%s5] sm:$0xff]
    %v94 = vld [vmem:[%s5 + $0x8] sm:$0xff]
    %v95 = vld [vmem:[%s5 + $0x10] sm:$0xff]
    %v96 = vld [vmem:[%s5 + $0x18] sm:$0xff]
    %v97 = vld [vmem:[%s5 + $0x20] sm:$0xff]
    %v98 = vld [vmem:[%s5 + $0x28] sm:$0xff]
    %v99 = vld [vmem:[%s5 + $0x30] sm:$0xff]
    %v100 = vld [vmem:[%s5 + $0x38] sm:$0xff]
    %v101 = vld [vmem:[%s5 + $0x40] sm:$0xff]
    %v102 = vld [vmem:[%s5 + $0x48] sm:$0xff]
    %v103 = vld [vmem:[%s5 + $0x50] sm:$0xff]
    %v104 = vld [vmem:[%s5 + $0x58] sm:$0xff]
    %v105 = vld [vmem:[%s5 + $0x60] sm:$0xff]
    %v106 = vld [vmem:[%s5 + $0x68] sm:$0xff]
    %v107 = vld [vmem:[%s5 + $0x70] sm:$0xff]
    %v108 = vld [vmem:[%s5 + $0x78] sm:$0xff]
    %v109 = vld [vmem:[%s6] sm:$0x1]
    %v111 = vperm.slane %v109, 0
    %113 = vmatpush.msra.mxu0 %v108
    %114 = vmatpush.msra.mxu0 %v107
    %115 = vmatpush.msra.mxu0 %v106
    %116 = vmatpush.msra.mxu0 %v105
    %117 = vmatpush.msra.mxu0 %v104
    %118 = vmatpush.msra.mxu0 %v103
    %119 = vmatpush.msra.mxu0 %v102
    %120 = vmatpush.msra.mxu0 %v101
    %121 = vmatpush.msra.mxu0 %v100
    %122 = vmatpush.msra.mxu0 %v99
    %123 = vmatpush.msra.mxu0 %v98
    %124 = vmatpush.msra.mxu0 %v97
    %125 = vmatpush.msra.mxu0 %v96
    %126 = vmatpush.msra.mxu0 %v95
    %127 = vmatpush.msra.mxu0 %v94
    %128 = vmatpush.msra.mxu0 %v93
    %129 = vmatmul.f32.gmra.mxu0 %v92
    %v130 = vpop.f32.mrf.mxu0
    %v131 = vadd.f32 %v111, %v130
    %132 = vdwg.mxu0
    %v133 = vmax.f32 %v131, 0.0
    %v134 = vld [vmem:[%s7] sm:$0xff]
    %v135 = vld [vmem:[%s7 + $0x8] sm:$0xff]
    %v136 = vld [vmem:[%s7 + $0x10] sm:$0xff]
    %v137 = vld [vmem:[%s7 + $0x18] sm:$0xff]
    %v138 = vld [vmem:[%s7 + $0x20] sm:$0xff]
    %v139 = vld [vmem:[%s7 + $0x28] sm:$0xff]
    %v140 = vld [vmem:[%s7 + $0x30] sm:$0xff]
    %v141 = vld [vmem:[%s7 + $0x38] sm:$0xff]
    %v142 = vld [vmem:[%s8] sm:$0x1]
    %v144 = vperm.slane %v142, 0
    %v147 = vsel %vm68, %v133, 0
    %149 = vmatpush.msra.mxu0 0.0
    %150 = vmatpush.msra.mxu0 0.0
    %151 = vmatpush.msra.mxu0 0.0
    %152 = vmatpush.msra.mxu0 0.0
    %153 = vmatpush.msra.mxu0 0.0
    %154 = vmatpush.msra.mxu0 0.0
    %155 = vmatpush.msra.mxu0 0.0
    %156 = vmatpush.msra.mxu0 0.0
    %157 = vmatpush.msra.mxu0 %v141
    %158 = vmatpush.msra.mxu0 %v140
    %159 = vmatpush.msra.mxu0 %v139
    %160 = vmatpush.msra.mxu0 %v138
    %161 = vmatpush.msra.mxu0 %v137
    %162 = vmatpush.msra.mxu0 %v136
    %163 = vmatpush.msra.mxu0 %v135
    %164 = vmatpush.msra.mxu0 %v134
    %165 = vmatmul.f32.gmra.mxu0 %v147
    %v166 = vpop.f32.mrf.mxu0
    %v167 = vadd.f32 %v144, %v166
    %168 = vdwg.mxu0
    %vm169 = vcmask 80896
    %170 = vst.msk [vmem:[#allocation2] sm:$0xff] %vm169, %v167
    // Predicated region
    $region38: #{complex_subject_predictor.1} parent=1 // pred_check
      _
    $region39: #{complex_subject_predictor.1} parent=1 // pred_check_branch
      %172 = sbr.rel (0) target = $region41
    $region40: #{complex_subject_predictor.1} parent=1 // pred_region
      %174 = vsyncadd [#allocation3], 0
      %s176 = sshll.u32 [#allocation2], 4
      %s177 = int_to_ptr.vmem [resolvable:$true] %s176
      %s178 = sshll.u32 %s9, 4
      %s179 = int_to_ptr.hbm [resolvable:$true] %s178
      %181 = dma.vmem_to_hbm [thread:$0]  %s177, 128, %s179, [#allocation3]
    $region41: #{complex_subject_predictor.1} parent=1 // pred_fallthru
      _
    // Predicated region
    $region42: #{complex_subject_predictor.1} parent=1 // pred_check
      _
    $region43: #{complex_subject_predictor.1} parent=1 // pred_check_branch
      %183 = sbr.rel (0) target = $region45
    $region44: #{complex_subject_predictor.1} parent=1 // pred_region
      %185 = dma.done [#allocation3], 128
    $region45: #{complex_subject_predictor.1} parent=1 // pred_fallthru
      _
    %186 = vsyncpa [#allocation3], 1

</llo_original>
